<compile_context>
chip_gen: v6e
topology: v6e:2x2x1
jax: 0.10.0
libtpu: 0.0.40
codegen_flags: <defaults>
</compile_context>

<pallas_src>
import functools

import jax
import jax.numpy as jnp
from jax.experimental import pallas as pl
from jax.experimental.pallas import tpu as pltpu


def _dilated_residual_kernel(dilation, n_time_tiles,
                             x_ref, x_hbm_ref, wd_ref, bd_ref, w1_ref, b1_ref,
                             o_ref, stack_ref, hl_ref, hr_ref, sem_ref):
    """One grid step: nb samples x one time tile.

    x_ref    : (nb, C, Tt)  activation block (auto-pipelined), native dtype
    x_hbm_ref: (N, C, T)    same input, raw HBM ref (halo DMAs only)
    wd_ref   : (C, 3C)      stacked dilated-conv weight [k=0 | k=1 | k=2]
    bd_ref   : (C, 1)       dilated-conv bias
    w1_ref   : (C, C)       1x1-conv weight
    b1_ref   : (C, 1)       1x1-conv bias
    o_ref    : (nb, C, Tt)  output block
    stack_ref: (3C, nb*Tt)  persistent stacked-RHS scratch (MXU dtype)
    hl_ref/hr_ref: (nb, C, hw) left/right halo landing buffers (input dtype)
    sem_ref  : DMA semaphores, shape (2,)
    """
    nb, c, tt = x_ref.shape
    d = dilation
    shift = min(d, tt)            # static; == d whenever the time axis is tiled
    inner = tt - shift            # static; 0 when dilation >= T (taps all in pad)
    mxu_dtype = stack_ref.dtype

    ti = pl.program_id(1)
    tiled = n_time_tiles > 1      # static Python bool

    # ---- 1. Kick off the tiny halo DMAs first so they overlap the tap copies.
    if tiled:
        t_total = x_hbm_ref.shape[2]
        n0 = pl.program_id(0) * nb
        t0 = ti * tt
        # Starts are clamped so descriptors are always in-bounds; the actual
        # start/wait is gated on the tile position below.
        l_start = jnp.maximum(t0 - shift, 0)
        r_start = jnp.minimum(t0 + tt, t_total - shift)

        def _left_copy():
            return pltpu.make_async_copy(
                x_hbm_ref.at[pl.ds(n0, nb), :, pl.ds(l_start, shift)],
                hl_ref, sem_ref.at[0])

        def _right_copy():
            return pltpu.make_async_copy(
                x_hbm_ref.at[pl.ds(n0, nb), :, pl.ds(r_start, shift)],
                hr_ref, sem_ref.at[1])

        @pl.when(ti > 0)
        def _():
            _left_copy().start()

        @pl.when(ti < n_time_tiles - 1)
        def _():
            _right_copy().start()

    # ---- 2. Shifted taps that live inside the resident block: plain slice
    #         stores straight into the stacked-RHS scratch (no concatenates).
    for b in range(nb):                         # nb is a small static constant
        xs = x_ref[b].astype(mxu_dtype)         # (C, Tt)
        col = b * tt
        stack_ref[c:2 * c, col:col + tt] = xs                        # centre k=1
        if inner > 0:
            stack_ref[0:c, col + shift:col + tt] = xs[:, :inner]     # left   k=0
            stack_ref[2 * c:3 * c, col:col + inner] = xs[:, shift:]  # right  k=2

    # ---- 3. Boundary columns of the shifted taps: zeros at the sequence edges,
    #         DMA'd neighbour data at interior tile edges.
    zeros_halo = jnp.zeros((c, shift), dtype=mxu_dtype)

    def _fill_left_zeros():
        for b in range(nb):
            stack_ref[0:c, b * tt:b * tt + shift] = zeros_halo

    def _fill_right_zeros():
        for b in range(nb):
            stack_ref[2 * c:3 * c, b * tt + inner:(b + 1) * tt] = zeros_halo

    if tiled:
        @pl.when(ti == 0)
        def _():
            _fill_left_zeros()

        @pl.when(ti > 0)
        def _():
            _left_copy().wait()
            for b in range(nb):
                stack_ref[0:c, b * tt:b * tt + shift] = hl_ref[b].astype(mxu_dtype)

        @pl.when(ti == n_time_tiles - 1)
        def _():
            _fill_right_zeros()

        @pl.when(ti < n_time_tiles - 1)
        def _():
            _right_copy().wait()
            for b in range(nb):
                stack_ref[2 * c:3 * c, b * tt + inner:(b + 1) * tt] = (
                    hr_ref[b].astype(mxu_dtype))
    else:
        _fill_left_zeros()
        _fill_right_zeros()

    # ---- 4. Fused dilated conv: one (C, 3C) @ (3C, nb*Tt) matmul, f32 acc.
    h = jnp.dot(wd_ref[...], stack_ref[...], preferred_element_type=jnp.float32)
    h = jnp.maximum(h + bd_ref[...].astype(jnp.float32), 0.0)       # bias + ReLU

    # ---- 5. 1x1 conv (+ bias): (C, C) @ (C, nb*Tt), f32 acc.
    y = jnp.dot(w1_ref[...], h.astype(w1_ref.dtype),
                preferred_element_type=jnp.float32)
    y = y + b1_ref[...].astype(jnp.float32)

    # ---- 6. Residual add + per-sample store (lane-dense when Tt % 128 == 0).
    # TODO(synk): dropout is identity in eval mode; training dropout not done.
    for b in range(nb):
        o_ref[b] = (x_ref[b].astype(jnp.float32)
                    + y[:, b * tt:(b + 1) * tt]).astype(o_ref.dtype)


def dilated_residual_layer(x_nct, w_dil, b_dil, w_1x1, b_1x1, *, dilation,
                           kernel_size=3, causal_conv=False, mxu_dtype=None):
    """Forward pass of DilatedResidualLayer.  x_nct: (N, C, T) (PyTorch NCW)."""
    # TODO(synk): only the default causal_conv=False, kernel_size=3 path is
    # implemented (these are the defaults used by the model).
    assert not causal_conv
    assert kernel_size == 3
    N, C, T = x_nct.shape
    K = kernel_size
    d = int(dilation)
    assert d >= 1                     # dilation >= T is allowed (taps all in pad)
    assert w_dil.shape == (C, C, K) and w_1x1.shape == (C, C, 1)
    # NOTE: C not a multiple of 8 still works but compiles to padded layouts.

    # MXU operand dtype.  Pass mxu_dtype=jnp.bfloat16 with f32 inputs to hit the
    # native MXU rate once C is large enough to be MXU-bound (accumulation stays
    # f32; the residual add always uses the original-precision x).
    mxu_dtype = (jnp.dtype(x_nct.dtype) if mxu_dtype is None
                 else jnp.dtype(mxu_dtype))

    wd_stacked = jnp.transpose(w_dil, (0, 2, 1)).reshape(C, K * C).astype(mxu_dtype)
    w1 = w_1x1[:, :, 0].astype(mxu_dtype)
    bd = b_dil.reshape(C, 1)
    b1 = b_1x1.reshape(C, 1)

    # ---- VMEM budget, derived from the actual chip (v5e/v6e: 128 MiB physical,
    #      v7x: 64 MiB), with headroom for compiler scratch.
    try:
        vmem_cap = int(pltpu.get_tpu_info().vmem_capacity_bytes)
    except Exception:                  # conservative fallback: v7x-sized VMEM
        vmem_cap = 64 * 1024 * 1024
    vmem_limit = min(int(vmem_cap * 0.85), 100 * 1024 * 1024)
    budget = int(vmem_limit * 0.6)     # per-grid-step working-set target

    itx = jnp.dtype(x_nct.dtype).itemsize
    itm = mxu_dtype.itemsize

    def step_bytes(nb, tt):
        """Explicit per-grid-step working-set model."""
        blk = nb * C * tt * itx
        shift = min(d, tt)
        return (2 * blk                      # input block, double-buffered
                + 2 * blk                    # output block, double-buffered
                + 3 * C * nb * tt * itm      # stacked-RHS scratch
                + 2 * nb * C * shift * itx   # halo scratches
                + 2 * C * nb * tt * 4        # h / y f32 intermediates
                + 4 * C * C * itm + 2 * C * 4)   # weights + biases

    # ---- Time tiling: cap the working set independently of T and keep output
    #      stores lane-dense.  Halo handling requires d <= T_tile.
    tt = T
    if T > 2048:
        for cand in (2048, 1024, 512, 256, 128):
            if T % cand == 0 and cand >= d and step_bytes(1, cand) <= budget:
                tt = cand
                break
        # TODO(synk): remainder tiles (T not divisible by an aligned tile size)
        # currently fall back to a single whole-T tile.
    n_time = T // tt

    # ---- Batch blocking: only useful with a single time tile (small T); keep
    #      at least 2 grid steps so v7x's second TensorCore has work.
    nb = 1
    if n_time == 1:
        for cand in (16, 8, 4, 2):
            if (N % cand == 0 and (N // cand) >= 2
                    and step_bytes(cand, tt) <= budget):
                nb = cand
                break

    halo_w = min(d, tt) if n_time > 1 else 1   # halo scratch unused when un-tiled

    kernel = functools.partial(_dilated_residual_kernel, d, n_time)

    out = pl.pallas_call(
        kernel,
        out_shape=jax.ShapeDtypeStruct((N, C, T), x_nct.dtype),
        grid=(N // nb, n_time),
        in_specs=[
            pl.BlockSpec((nb, C, tt), lambda n, t: (n, 0, t)),   # activations
            pl.BlockSpec(memory_space=pl.ANY),                   # same x, halo DMAs
            pl.BlockSpec((C, K * C), lambda n, t: (0, 0)),       # stacked W_dil
            pl.BlockSpec((C, 1), lambda n, t: (0, 0)),           # b_dil
            pl.BlockSpec((C, C), lambda n, t: (0, 0)),           # W_1x1
            pl.BlockSpec((C, 1), lambda n, t: (0, 0)),           # b_1x1
        ],
        out_specs=pl.BlockSpec((nb, C, tt), lambda n, t: (n, 0, t)),
        scratch_shapes=[
            pltpu.VMEM((3 * C, nb * tt), mxu_dtype),     # stacked taps (RHS)
            pltpu.VMEM((nb, C, halo_w), x_nct.dtype),    # left halo
            pltpu.VMEM((nb, C, halo_w), x_nct.dtype),    # right halo
            pltpu.SemaphoreType.DMA((2,)),
        ],
        compiler_params=pltpu.CompilerParams(
            dimension_semantics=("parallel", "parallel"),
            vmem_limit_bytes=vmem_limit),
    )(x_nct, x_nct, wd_stacked, bd, w1, b1)
    return out


def _reference(x_nct, w_dil, b_dil, w_1x1, b_1x1, *, dilation):
    """Plain-JAX reference (matches PyTorch Conv1d, eval-mode dropout)."""
    y = jax.lax.conv_general_dilated(
        x_nct, w_dil, window_strides=(1,), padding=[(dilation, dilation)],
        rhs_dilation=(dilation,), dimension_numbers=("NCH", "OIH", "NCH"))
    y = jax.nn.relu(y + b_dil[None, :, None])
    z = jax.lax.conv_general_dilated(
        y, w_1x1, window_strides=(1,), padding=[(0, 0)],
        dimension_numbers=("NCH", "OIH", "NCH"))
    z = z + b_1x1[None, :, None]
    return x_nct + z


if __name__ == "__main__":
    key = jax.random.PRNGKey(0)

    def make_params(k, C, K=3):
        k1, k2, k3, k4 = jax.random.split(k, 4)
        w_dil = 0.1 * jax.random.normal(k1, (C, C, K), dtype=jnp.float32)
        b_dil = 0.1 * jax.random.normal(k2, (C,), dtype=jnp.float32)
        w_1x1 = 0.1 * jax.random.normal(k3, (C, C, 1), dtype=jnp.float32)
        b_1x1 = 0.1 * jax.random.normal(k4, (C,), dtype=jnp.float32)
        return w_dil, b_dil, w_1x1, b_1x1

    def check(k, N, C, T, dilation, tol):
        kx, kp = jax.random.split(k)
        x = jax.random.normal(kx, (N, C, T), dtype=jnp.float32)
        w_dil, b_dil, w_1x1, b_1x1 = make_params(kp, C)
        out = dilated_residual_layer(x, w_dil, b_dil, w_1x1, b_1x1,
                                     dilation=dilation)
        out = jax.block_until_ready(out)
        ref = _reference(x, w_dil, b_dil, w_1x1, b_1x1, dilation=dilation)
        assert out.shape == (N, C, T)
        assert jnp.allclose(out, ref, atol=tol, rtol=tol), (
            f"mismatch vs reference (N={N}, C={C}, T={T}, d={dilation})")

    k1, k2, k3 = jax.random.split(key, 3)
    # Small shapes consistent with the module (single time tile path).
    check(k1, N=2, C=32, T=16, dilation=2, tol=1e-4)
    # Long sequence: exercises the time-tiled path with halo DMAs (MS-TCN-like).
    check(k2, N=2, C=64, T=4096, dilation=16, tol=1e-3)
    # Dilation >= T: all off-centre taps fall entirely in the zero padding.
    check(k3, N=1, C=8, T=16, dilation=32, tol=1e-4)

    print("KERNEL_OK")
</pallas_src>

<mosaic_0001>
module attributes {stable_mosaic.version = 11 : i64} {
  func.func @_dilated_residual_kernel(%arg0: i32, %arg1: i32, %arg2: memref<1x32x16xf32, #tpu.memory_space<vmem>>, %arg3: memref<2x32x16xf32, #tpu.memory_space<any>>, %arg4: memref<32x96xf32, #tpu.memory_space<vmem>>, %arg5: memref<32x1xf32, #tpu.memory_space<vmem>>, %arg6: memref<32x32xf32, #tpu.memory_space<vmem>>, %arg7: memref<32x1xf32, #tpu.memory_space<vmem>>, %arg8: memref<1x32x16xf32, #tpu.memory_space<vmem>>, %arg9: memref<96x16xf32, #tpu.memory_space<vmem>>, %arg10: memref<1x32x1xf32, #tpu.memory_space<vmem>>, %arg11: memref<1x32x1xf32, #tpu.memory_space<vmem>>, %arg12: memref<2x!tpu.dma_semaphore, #tpu.memory_space<semaphore_mem>>) attributes {dimension_semantics = [#tpu.dimension_semantics<parallel>, #tpu.dimension_semantics<parallel>], iteration_bounds = array<i64: 2, 1>, scalar_prefetch = 0 : i64, scratch_operands = 4 : i64, tpu.core_type = #tpu.core_type<tc>, window_params = [{transform_indices = @transform_0, window_bounds = array<i64: 1, 32, 16>}, {}, {pipeline_mode = #tpu.pipeline_mode<synchronous>, transform_indices = @transform_2, window_bounds = array<i64: 32, 96>}, {pipeline_mode = #tpu.pipeline_mode<synchronous>, transform_indices = @transform_3, window_bounds = array<i64: 32, 1>}, {pipeline_mode = #tpu.pipeline_mode<synchronous>, transform_indices = @transform_4, window_bounds = array<i64: 32, 32>}, {pipeline_mode = #tpu.pipeline_mode<synchronous>, transform_indices = @transform_5, window_bounds = array<i64: 32, 1>}, {transform_indices = @transform_6, window_bounds = array<i64: 1, 32, 16>}]} {
    %c0 = arith.constant 0 : index
    %c0_0 = arith.constant 0 : index
    %c0_1 = arith.constant 0 : index
    %0 = vector.load %arg2[%c0, %c0_0, %c0_1] : memref<1x32x16xf32, #tpu.memory_space<vmem>>, vector<1x32x16xf32>
    %1 = vector.shape_cast %0 : vector<1x32x16xf32> to vector<32x16xf32>
    %c32 = arith.constant 32 : index
    %c0_2 = arith.constant 0 : index
    %2 = vector.load %arg9[%c32, %c0_2] : memref<96x16xf32, #tpu.memory_space<vmem>>, vector<32x16xf32>
    tpu.vector_store %arg9[%c32, %c0_2], %1 {strides = array<i32>} : memref<96x16xf32, #tpu.memory_space<vmem>>, vector<32x16xf32>,
    %3 = vector.extract_strided_slice %1 {offsets = [0, 0], sizes = [32, 14], strides = [1, 1]} : vector<32x16xf32> to vector<32x14xf32>
    %c0_3 = arith.constant 0 : index
    %c2 = arith.constant 2 : index
    %4 = vector.load %arg9[%c0_3, %c2] : memref<96x16xf32, #tpu.memory_space<vmem>>, vector<32x14xf32>
    tpu.vector_store %arg9[%c0_3, %c2], %3 {strides = array<i32>} : memref<96x16xf32, #tpu.memory_space<vmem>>, vector<32x14xf32>,
    %5 = vector.extract_strided_slice %1 {offsets = [0, 2], sizes = [32, 14], strides = [1, 1]} : vector<32x16xf32> to vector<32x14xf32>
    %c64 = arith.constant 64 : index
    %c0_4 = arith.constant 0 : index
    %6 = vector.load %arg9[%c64, %c0_4] : memref<96x16xf32, #tpu.memory_space<vmem>>, vector<32x14xf32>
    tpu.vector_store %arg9[%c64, %c0_4], %5 {strides = array<i32>} : memref<96x16xf32, #tpu.memory_space<vmem>>, vector<32x14xf32>,
    %cst = arith.constant 0.000000e+00 : f32
    %7 = vector.broadcast %cst : f32 to vector<32x2xf32>
    %c0_5 = arith.constant 0 : index
    %c0_6 = arith.constant 0 : index
    %8 = vector.load %arg9[%c0_5, %c0_6] : memref<96x16xf32, #tpu.memory_space<vmem>>, vector<32x2xf32>
    tpu.vector_store %arg9[%c0_5, %c0_6], %7 {strides = array<i32>} : memref<96x16xf32, #tpu.memory_space<vmem>>, vector<32x2xf32>,
    %c64_7 = arith.constant 64 : index
    %c14 = arith.constant 14 : index
    %9 = vector.load %arg9[%c64_7, %c14] : memref<96x16xf32, #tpu.memory_space<vmem>>, vector<32x2xf32>
    tpu.vector_store %arg9[%c64_7, %c14], %7 {strides = array<i32>} : memref<96x16xf32, #tpu.memory_space<vmem>>, vector<32x2xf32>,
    %c0_8 = arith.constant 0 : index
    %c0_9 = arith.constant 0 : index
    %10 = vector.load %arg4[%c0_8, %c0_9] : memref<32x96xf32, #tpu.memory_space<vmem>>, vector<32x96xf32>
    %c0_10 = arith.constant 0 : index
    %c0_11 = arith.constant 0 : index
    %11 = vector.load %arg9[%c0_10, %c0_11] : memref<96x16xf32, #tpu.memory_space<vmem>>, vector<96x16xf32>
    %cst_12 = arith.constant dense<0.000000e+00> : vector<32x16xf32>
    %12 = tpu.matmul %10, %11, %cst_12 {dimension_numbers = #tpu.dot_dimension_numbers<[1], [0], [0], [1], [0, 0, 1, 1], [], []>} : vector<32x96xf32>, vector<96x16xf32>, vector<32x16xf32> -> vector<32x16xf32>
    %c0_13 = arith.constant 0 : index
    %c0_14 = arith.constant 0 : index
    %13 = vector.load %arg5[%c0_13, %c0_14] : memref<32x1xf32, #tpu.memory_space<vmem>>, vector<32x1xf32>
    %14 = vector.broadcast %13 : vector<32x1xf32> to vector<32x16xf32>
    %15 = arith.addf %12, %14 : vector<32x16xf32>
    %cst_15 = arith.constant 0.000000e+00 : f32
    %16 = vector.broadcast %cst_15 : f32 to vector<32x16xf32>
    %17 = arith.maximumf %15, %16 : vector<32x16xf32>
    %c0_16 = arith.constant 0 : index
    %c0_17 = arith.constant 0 : index
    %18 = vector.load %arg6[%c0_16, %c0_17] : memref<32x32xf32, #tpu.memory_space<vmem>>, vector<32x32xf32>
    %cst_18 = arith.constant dense<0.000000e+00> : vector<32x16xf32>
    %19 = tpu.matmul %18, %17, %cst_18 {dimension_numbers = #tpu.dot_dimension_numbers<[1], [0], [0], [1], [0, 0, 1, 1], [], []>} : vector<32x32xf32>, vector<32x16xf32>, vector<32x16xf32> -> vector<32x16xf32>
    %c0_19 = arith.constant 0 : index
    %c0_20 = arith.constant 0 : index
    %20 = vector.load %arg7[%c0_19, %c0_20] : memref<32x1xf32, #tpu.memory_space<vmem>>, vector<32x1xf32>
    %21 = vector.broadcast %20 : vector<32x1xf32> to vector<32x16xf32>
    %22 = arith.addf %19, %21 : vector<32x16xf32>
    %c0_21 = arith.constant 0 : index
    %c0_22 = arith.constant 0 : index
    %c0_23 = arith.constant 0 : index
    %23 = vector.load %arg2[%c0_21, %c0_22, %c0_23] : memref<1x32x16xf32, #tpu.memory_space<vmem>>, vector<1x32x16xf32>
    %24 = vector.shape_cast %23 : vector<1x32x16xf32> to vector<32x16xf32>
    %25 = arith.addf %24, %22 : vector<32x16xf32>
    %c0_24 = arith.constant 0 : index
    %c0_25 = arith.constant 0 : index
    %c0_26 = arith.constant 0 : index
    %26 = vector.load %arg8[%c0_24, %c0_25, %c0_26] : memref<1x32x16xf32, #tpu.memory_space<vmem>>, vector<1x32x16xf32>
    %27 = vector.shape_cast %26 : vector<1x32x16xf32> to vector<32x16xf32>
    %28 = vector.shape_cast %25 : vector<32x16xf32> to vector<1x32x16xf32>
    tpu.vector_store %arg8[%c0_24, %c0_25, %c0_26], %28 {strides = array<i32>} : memref<1x32x16xf32, #tpu.memory_space<vmem>>, vector<1x32x16xf32>,
    return
  }
  func.func @transform_0(%arg0: i32, %arg1: i32) -> (i32, i32, i32) {
    %c0_i32 = arith.constant 0 : i32
    %c0_i32_0 = arith.constant 0 : i32
    return %arg0, %c0_i32, %arg1 : i32, i32, i32
  }
  func.func @transform_2(%arg0: i32, %arg1: i32) -> (i32, i32) {
    %c0_i32 = arith.constant 0 : i32
    %c0_i32_0 = arith.constant 0 : i32
    %c0_i32_1 = arith.constant 0 : i32
    return %c0_i32, %c0_i32_0 : i32, i32
  }
  func.func @transform_3(%arg0: i32, %arg1: i32) -> (i32, i32) {
    %c0_i32 = arith.constant 0 : i32
    %c0_i32_0 = arith.constant 0 : i32
    %c0_i32_1 = arith.constant 0 : i32
    return %c0_i32, %c0_i32_0 : i32, i32
  }
  func.func @transform_4(%arg0: i32, %arg1: i32) -> (i32, i32) {
    %c0_i32 = arith.constant 0 : i32
    %c0_i32_0 = arith.constant 0 : i32
    %c0_i32_1 = arith.constant 0 : i32
    return %c0_i32, %c0_i32_0 : i32, i32
  }
  func.func @transform_5(%arg0: i32, %arg1: i32) -> (i32, i32) {
    %c0_i32 = arith.constant 0 : i32
    %c0_i32_0 = arith.constant 0 : i32
    %c0_i32_1 = arith.constant 0 : i32
    return %c0_i32, %c0_i32_0 : i32, i32
  }
  func.func @transform_6(%arg0: i32, %arg1: i32) -> (i32, i32, i32) {
    %c0_i32 = arith.constant 0 : i32
    %c0_i32_0 = arith.constant 0 : i32
    return %arg0, %c0_i32, %arg1 : i32, i32, i32
  }
}

</mosaic_0001>

<llo_original>
// kernel: tpu_custom_call.1
$region0: #{tpu_custom_call.1}
  #allocation0 [shape = 'u32[]', space=smem, size = 0x4, offset = 0x4, fixed_abs, tag = 'smem constant byte address 0x4 - core index']
  #allocation1 [shape = 'u32[144,128]{1,0:T(1,128)}', space=vmem, size = 0x12000, scoped, tag = 'internal scratch']
  #allocation2 [shape = 'f32[96,16]{1,0:T(8,128)}', space=vmem, size = 0xc000, scoped, tag = 'scratch operand']
  #allocation3 [shape = 'f32[1,32,1]{2,1,0:T(8,128)}', space=vmem, size = 0x4000, scoped, tag = 'scratch operand']
  #allocation4 [shape = 'f32[1,32,1]{2,1,0:T(8,128)}', space=vmem, size = 0x4000, scoped, tag = 'scratch operand']
  #allocation5 [shape = 's32[2]{0}', space=sflag, size = 0x8, scoped, tag = 'scratch operand']
  %s0 = inlined_call_operand.vmem [shape: f32[2,32,16], index: 0, kind: input, shape index: {}]
  %s1 = inlined_call_operand.vmem [shape: f32[2,32,16], index: 1, kind: input, shape index: {}]
  %s2 = inlined_call_operand.vmem [shape: f32[32,96], index: 2, kind: input, shape index: {}]
  %s3 = inlined_call_operand.vmem [shape: f32[32,1], index: 3, kind: input, shape index: {}]
  %s4 = inlined_call_operand.vmem [shape: f32[32,32], index: 4, kind: input, shape index: {}]
  %s5 = inlined_call_operand.vmem [shape: f32[32,1], index: 5, kind: input, shape index: {}]
  %s6 = inlined_call_operand.vmem [shape: f32[2,32,16], index: 6, kind: output, shape index: {}]
  %s7 = sld [smem:[#allocation0]]
  $region53: #{tpu_custom_call.1} parent=0
    _
  %s9 = ssub.s32 1, %s7
  %s10 = scalar_select 0, %s9, %s7
  loop: start=0, step=1, limit=4
  $region2: #{tpu_custom_call.1} parent=0 // loop_pre_header
    _
  $region3: #{tpu_custom_call.1} parent=0 // loop_header
    %s12 = sphi 0, %s16
    %p13 = scmp.ge.s32.totalorder %s12, 4
    %s19 = sphi 0, %s31
    %s20 = sphi 0, %s27
    %s21 = sphi 0, %s19
    %s22 = sphi 0, %s20
    %s23 = sphi 0, %s21
    %s24 = sphi 0, %s22
    %s36 = sphi 0, %s38
    %s39 = sphi 0, %s36
    %s40 = sphi 0, %s39
    %s56 = sphi 0, %s40
    %s60 = sphi 0, %s60
    %s62 = sphi 0, %s60
    %s63 = sphi 0, %s62
    %s77 = sphi 0, %s63
    %s81 = sphi 0, %s81
    %s83 = sphi 0, %s81
    %s84 = sphi 0, %s83
    %s98 = sphi 0, %s84
    %s102 = sphi 0, %s102
    %s104 = sphi 0, %s102
    %s105 = sphi 0, %s104
    %s119 = sphi 0, %s105
    %s123 = sphi 0, %s123
    %s125 = sphi 0, %s123
    %s126 = sphi 0, %s125
    %s140 = sphi 0, %s126
    %s148 = sphi 0, %s150
    %s151 = sphi 0, %s148
    %s152 = sphi 0, %s151
    %s168 = sphi 0, %s152
  $region4: #{tpu_custom_call.1} parent=0 // loop_header_branch
    %15 = sbr.rel (%p13) target = $region8
  $region5: #{tpu_custom_call.1} parent=0 // loop_body
    %s17 = ssub.s32 %s12, 1
    %s18 = ssub.s32 %s12, 2
    %s25 = sadd.s32 1, %s20
    %p26 = scmp.ge.s32.totalorder %s25, 1
    %s27 = scalar_select %p26, 0, %s25
    %s28 = sadd.s32 1, %s19
    %s29 = scalar_select %p26, %s28, %s19
    %p30 = scmp.ge.s32.totalorder %s29, 2
    %s31 = scalar_select %p30, 0, %s29
    %s32 = ssub.s32 %s19, %s31
    %s33 = ssub.s32 %s20, %s27
    %s34 = sor.u32 %s32, %s33
    %p35 = scmp.eq.s32.totalorder %s34, 0
    %s37 = sadd.s32 %s36, 1
    %s38 = scalar_select %p35, %s36, %s37
    %p41 = pneg %p35
    %p42 = scmp.eq.s32.totalorder %s12, 1
    %p43 = por %p41, %p42
    %p44 = scmp.ne.s32.totalorder %s36, %s39
    %p45 = scmp.eq.s32.totalorder %s12, 0
    %p46 = por %p44, %p45
    %p47 = scmp.ne.s32.totalorder %s36, %s39
    %p48 = scmp.eq.s32.totalorder %s17, 1
    %p49 = por %p47, %p48
    %p50 = scmp.ne.s32.totalorder %s39, %s40
    %p51 = scmp.eq.s32.totalorder %s17, 0
    %p52 = por %p50, %p51
    %p53 = scmp.ne.s32.totalorder %s39, %s40
    %p54 = scmp.eq.s32.totalorder %s18, 1
    %p55 = por %p53, %p54
    %p57 = scmp.ne.s32.totalorder %s40, %s56
    %p58 = scmp.eq.s32.totalorder %s18, 0
    %p59 = por %p57, %p58
    %s61 = sadd.s32 %s60, 1
    %p64 = scmp.eq.s32.totalorder %s12, 1
    %p65 = scmp.ne.s32.totalorder %s60, %s62
    %p66 = scmp.eq.s32.totalorder %s12, 0
    %p67 = por %p65, %p66
    %p68 = scmp.ne.s32.totalorder %s60, %s62
    %p69 = scmp.eq.s32.totalorder %s17, 1
    %p70 = por %p68, %p69
    %p71 = scmp.ne.s32.totalorder %s62, %s63
    %p72 = scmp.eq.s32.totalorder %s17, 0
    %p73 = por %p71, %p72
    %p74 = scmp.ne.s32.totalorder %s62, %s63
    %p75 = scmp.eq.s32.totalorder %s18, 1
    %p76 = por %p74, %p75
    %p78 = scmp.ne.s32.totalorder %s63, %s77
    %p79 = scmp.eq.s32.totalorder %s18, 0
    %p80 = por %p78, %p79
    %s82 = sadd.s32 %s81, 1
    %p85 = scmp.eq.s32.totalorder %s12, 1
    %p86 = scmp.ne.s32.totalorder %s81, %s83
    %p87 = scmp.eq.s32.totalorder %s12, 0
    %p88 = por %p86, %p87
    %p89 = scmp.ne.s32.totalorder %s81, %s83
    %p90 = scmp.eq.s32.totalorder %s17, 1
    %p91 = por %p89, %p90
    %p92 = scmp.ne.s32.totalorder %s83, %s84
    %p93 = scmp.eq.s32.totalorder %s17, 0
    %p94 = por %p92, %p93
    %p95 = scmp.ne.s32.totalorder %s83, %s84
    %p96 = scmp.eq.s32.totalorder %s18, 1
    %p97 = por %p95, %p96
    %p99 = scmp.ne.s32.totalorder %s84, %s98
    %p100 = scmp.eq.s32.totalorder %s18, 0
    %p101 = por %p99, %p100
    %s103 = sadd.s32 %s102, 1
    %p106 = scmp.eq.s32.totalorder %s12, 1
    %p107 = scmp.ne.s32.totalorder %s102, %s104
    %p108 = scmp.eq.s32.totalorder %s12, 0
    %p109 = por %p107, %p108
    %p110 = scmp.ne.s32.totalorder %s102, %s104
    %p111 = scmp.eq.s32.totalorder %s17, 1
    %p112 = por %p110, %p111
    %p113 = scmp.ne.s32.totalorder %s104, %s105
    %p114 = scmp.eq.s32.totalorder %s17, 0
    %p115 = por %p113, %p114
    %p116 = scmp.ne.s32.totalorder %s104, %s105
    %p117 = scmp.eq.s32.totalorder %s18, 1
    %p118 = por %p116, %p117
    %p120 = scmp.ne.s32.totalorder %s105, %s119
    %p121 = scmp.eq.s32.totalorder %s18, 0
    %p122 = por %p120, %p121
    %s124 = sadd.s32 %s123, 1
    %p127 = scmp.eq.s32.totalorder %s12, 1
    %p128 = scmp.ne.s32.totalorder %s123, %s125
    %p129 = scmp.eq.s32.totalorder %s12, 0
    %p130 = por %p128, %p129
    %p131 = scmp.ne.s32.totalorder %s123, %s125
    %p132 = scmp.eq.s32.totalorder %s17, 1
    %p133 = por %p131, %p132
    %p134 = scmp.ne.s32.totalorder %s125, %s126
    %p135 = scmp.eq.s32.totalorder %s17, 0
    %p136 = por %p134, %p135
    %p137 = scmp.ne.s32.totalorder %s125, %s126
    %p138 = scmp.eq.s32.totalorder %s18, 1
    %p139 = por %p137, %p138
    %p141 = scmp.ne.s32.totalorder %s126, %s140
    %p142 = scmp.eq.s32.totalorder %s18, 0
    %p143 = por %p141, %p142
    %s144 = ssub.s32 %s19, %s31
    %s145 = ssub.s32 %s20, %s27
    %s146 = sor.u32 %s144, %s145
    %p147 = scmp.eq.s32.totalorder %s146, 0
    %s149 = sadd.s32 %s148, 1
    %s150 = scalar_select %p147, %s148, %s149
    %p153 = pneg %p147
    %p154 = scmp.eq.s32.totalorder %s12, 1
    %p155 = por %p153, %p154
    %p156 = scmp.ne.s32.totalorder %s148, %s151
    %p157 = scmp.eq.s32.totalorder %s12, 0
    %p158 = por %p156, %p157
    %p159 = scmp.ne.s32.totalorder %s148, %s151
    %p160 = scmp.eq.s32.totalorder %s17, 1
    %p161 = por %p159, %p160
    %p162 = scmp.ne.s32.totalorder %s151, %s152
    %p163 = scmp.eq.s32.totalorder %s17, 0
    %p164 = por %p162, %p163
    %p165 = scmp.ne.s32.totalorder %s151, %s152
    %p166 = scmp.eq.s32.totalorder %s18, 1
    %p167 = por %p165, %p166
    %p169 = scmp.ne.s32.totalorder %s152, %s168
    %p170 = scmp.eq.s32.totalorder %s18, 0
    %p171 = por %p169, %p170
    %p172 = scmp.le.s32.totalorder 1, %s12
    %p173 = scmp.lt.s32.totalorder %s12, 3
    %p174 = pnand %p172, %p173
    %p175 = pneg %p174
    // Predicated region
    $region9: #{tpu_custom_call.1} parent=5 // pred_check
      _
    $region10: #{tpu_custom_call.1} parent=5 // pred_check_branch
      %177 = sbr.rel (%p174) target = $region12
    $region11: #{tpu_custom_call.1} parent=5 // pred_region
      %s178 = ssub.s32 %s12, 1
      // Predicated region
      $region13: #{tpu_custom_call.1} parent=11 // pred_check
        %p179 = pneg %p73
      $region14: #{tpu_custom_call.1} parent=11 // pred_check_branch
        %181 = sbr.rel (%p179) target = $region16
      $region15: #{tpu_custom_call.1} parent=11 // pred_region
        _
      $region16: #{tpu_custom_call.1} parent=11 // pred_fallthru
        _
      // Predicated region
      $region17: #{tpu_custom_call.1} parent=11 // pred_check
        %p182 = pneg %p94
      $region18: #{tpu_custom_call.1} parent=11 // pred_check_branch
        %184 = sbr.rel (%p182) target = $region20
      $region19: #{tpu_custom_call.1} parent=11 // pred_region
        _
      $region20: #{tpu_custom_call.1} parent=11 // pred_fallthru
        _
      // Predicated region
      $region21: #{tpu_custom_call.1} parent=11 // pred_check
        %p185 = pneg %p115
      $region22: #{tpu_custom_call.1} parent=11 // pred_check_branch
        %187 = sbr.rel (%p185) target = $region24
      $region23: #{tpu_custom_call.1} parent=11 // pred_region
        _
      $region24: #{tpu_custom_call.1} parent=11 // pred_fallthru
        _
      // Predicated region
      $region25: #{tpu_custom_call.1} parent=11 // pred_check
        %p188 = pneg %p136
      $region26: #{tpu_custom_call.1} parent=11 // pred_check_branch
        %190 = sbr.rel (%p188) target = $region28
      $region27: #{tpu_custom_call.1} parent=11 // pred_region
        _
      $region28: #{tpu_custom_call.1} parent=11 // pred_fallthru
        _
    $region12: #{tpu_custom_call.1} parent=5 // pred_fallthru
      _
    %p191 = scmp.lt.s32.totalorder %s12, 2
    // Predicated region
    $region29: #{tpu_custom_call.1} parent=5 // pred_check
      %p192 = pneg %p191
    $region30: #{tpu_custom_call.1} parent=5 // pred_check_branch
      %194 = sbr.rel (%p192) target = $region32
    $region31: #{tpu_custom_call.1} parent=5 // pred_region
      // Predicated region
      $region33: #{tpu_custom_call.1} parent=31 // pred_check
        %p195 = pneg %p46
      $region34: #{tpu_custom_call.1} parent=31 // pred_check_branch
        %197 = sbr.rel (%p195) target = $region36
      $region35: #{tpu_custom_call.1} parent=31 // pred_region
        %p198 = scmp.lt.s32.totalorder %s19, 1
        %s199 = scalar_select %p198, %s19, 1
        %p200 = scmp.lt.s32.totalorder %s20, 0
        %s201 = scalar_select %p200, %s20, 0
        %s202 = smul.addr %s199, 4
        %s203 = sadd.s32 %s201, %s202
        %s204 = smul.addr %s203, 8
        %s205 = scalar_lea.vmem %s0, %s204
      $region36: #{tpu_custom_call.1} parent=31 // pred_fallthru
        _
    $region32: #{tpu_custom_call.1} parent=5 // pred_fallthru
      _
    %p206 = scmp.le.s32.totalorder 1, %s12
    %p207 = scmp.lt.s32.totalorder %s12, 3
    %p208 = pnand %p206, %p207
    %p209 = pneg %p208
    // Predicated region
    $region37: #{tpu_custom_call.1} parent=5 // pred_check
      _
    $region38: #{tpu_custom_call.1} parent=5 // pred_check_branch
      %211 = sbr.rel (%p208) target = $region40
    $region39: #{tpu_custom_call.1} parent=5 // pred_region
      %s212 = ssub.s32 %s12, 1
      %p213 = scmp.lt.s32.totalorder %s21, 1
      %s214 = scalar_select %p213, %s21, 1
      %p215 = scmp.lt.s32.totalorder %s22, 0
      %s216 = scalar_select %p215, %s22, 0
      %s217 = smul.addr %s214, 4
      %s218 = sadd.s32 %s216, %s217
      %s219 = smul.addr %s218, 8
      %s220 = scalar_lea.vmem %s0, %s219
      %p221 = pneg %p52
      %p222 = pneg %p49
      %p223 = pneg %p73
      %p224 = pneg %p70
      %p225 = pneg %p94
      %p226 = pneg %p91
      %p227 = pneg %p115
      %p228 = pneg %p112
      %p229 = pneg %p136
      %p230 = pneg %p133
      %p231 = pneg %p164
      %p232 = pneg %p161
      %p233 = scmp.lt.s32.totalorder %s21, 1
      %s234 = scalar_select %p233, %s21, 1
      %p235 = scmp.lt.s32.totalorder %s22, 0
      %s236 = scalar_select %p235, %s22, 0
      %s237 = smul.addr %s234, 4
      %s238 = sadd.s32 %s236, %s237
      %s239 = smul.addr %s238, 8
      %s240 = scalar_lea.vmem %s6, %s239
      %p241 = scmp.lt.s32.totalorder %s21, 1
      %s242 = scalar_select %p241, %s21, 1
      %p243 = scmp.lt.s32.totalorder %s22, 0
      %s244 = scalar_select %p243, %s22, 0
      %s245 = smul.addr %s242, 4
      %s246 = sadd.s32 %s244, %s245
      %s247 = smul.addr %s246, 8
      %s248 = scalar_lea.vmem %s0, %s247
      %p249 = scmp.lt.s32.totalorder %s21, 1
      %s250 = scalar_select %p249, %s21, 1
      %p251 = scmp.lt.s32.totalorder %s22, 0
      %s252 = scalar_select %p251, %s22, 0
      %s253 = smul.addr %s250, 4
      %s254 = sadd.s32 %s252, %s253
      %s255 = smul.addr %s254, 8
      %s256 = scalar_lea.vmem %s6, %s255
      %v257 = vld [vmem:[%s248] sm:$0xff]
      %v258 = vld [vmem:[%s248 + $0x8] sm:$0xff]
      %v259 = vld [vmem:[%s248 + $0x10] sm:$0xff]
      %v260 = vld [vmem:[%s248 + $0x18] sm:$0xff]
      %vm261 = vcmask 130048
      %262 = vst.msk [vmem:[#allocation2 + $0x20] sm:$0xff] %vm261, %v257
      %263 = vst.msk [vmem:[#allocation2 + $0x28] sm:$0xff] %vm261, %v258
      %264 = vst.msk [vmem:[#allocation2 + $0x30] sm:$0xff] %vm261, %v259
      %265 = vst.msk [vmem:[#allocation2 + $0x38] sm:$0xff] %vm261, %v260
      %270 = vrot.lane.b32.xlu0 %v257, 2
      %v271 = vpop.permute.xlu0 %270
      %272 = vrot.lane.b32.xlu0 %v258, 2
      %v273 = vpop.permute.xlu0 %272
      %274 = vrot.lane.b32.xlu0 %v259, 2
      %v275 = vpop.permute.xlu0 %274
      %276 = vrot.lane.b32.xlu0 %v260, 2
      %v277 = vpop.permute.xlu0 %276
      %vm282 = vcmask 130064
      %283 = vst.msk [vmem:[#allocation2] sm:$0xff] %vm282, %v271
      %284 = vst.msk [vmem:[#allocation2 + $0x8] sm:$0xff] %vm282, %v273
      %285 = vst.msk [vmem:[#allocation2 + $0x10] sm:$0xff] %vm282, %v275
      %286 = vst.msk [vmem:[#allocation2 + $0x18] sm:$0xff] %vm282, %v277
      %287 = vrot.lane.b32.xlu0 %v257, 126
      %v288 = vpop.permute.xlu0 %287
      %289 = vrot.lane.b32.xlu0 %v258, 126
      %v290 = vpop.permute.xlu0 %289
      %291 = vrot.lane.b32.xlu0 %v259, 126
      %v292 = vpop.permute.xlu0 %291
      %293 = vrot.lane.b32.xlu0 %v260, 126
      %v294 = vpop.permute.xlu0 %293
      %vm299 = vcmask 113664
      %300 = vst.msk [vmem:[#allocation2 + $0x40] sm:$0xff] %vm299, %v288
      %301 = vst.msk [vmem:[#allocation2 + $0x48] sm:$0xff] %vm299, %v290
      %302 = vst.msk [vmem:[#allocation2 + $0x50] sm:$0xff] %vm299, %v292
      %303 = vst.msk [vmem:[#allocation2 + $0x58] sm:$0xff] %vm299, %v294
      %vm304 = vcmask 15360
      %305 = vst.msk [vmem:[#allocation2] sm:$0xff] %vm304, 0.0
      %306 = vst.msk [vmem:[#allocation2 + $0x8] sm:$0xff] %vm304, 0.0
      %307 = vst.msk [vmem:[#allocation2 + $0x10] sm:$0xff] %vm304, 0.0
      %308 = vst.msk [vmem:[#allocation2 + $0x18] sm:$0xff] %vm304, 0.0
      %vm309 = vcmask 130160
      %310 = vst.msk [vmem:[#allocation2 + $0x40] sm:$0xff] %vm309, 0.0
      %311 = vst.msk [vmem:[#allocation2 + $0x48] sm:$0xff] %vm309, 0.0
      %312 = vst.msk [vmem:[#allocation2 + $0x50] sm:$0xff] %vm309, 0.0
      %313 = vst.msk [vmem:[#allocation2 + $0x58] sm:$0xff] %vm309, 0.0
      %v314 = vld [vmem:[%s2] sm:$0xff]
      %v315 = vld [vmem:[%s2 + $0x8] sm:$0xff]
      %v316 = vld [vmem:[%s2 + $0x10] sm:$0xff]
      %v317 = vld [vmem:[%s2 + $0x18] sm:$0xff]
      %v318 = vld [vmem:[#allocation2] sm:$0xff]
      %v319 = vld [vmem:[#allocation2 + $0x8] sm:$0xff]
      %v320 = vld [vmem:[#allocation2 + $0x10] sm:$0xff]
      %v321 = vld [vmem:[#allocation2 + $0x18] sm:$0xff]
      %v322 = vld [vmem:[#allocation2 + $0x20] sm:$0xff]
      %v323 = vld [vmem:[#allocation2 + $0x28] sm:$0xff]
      %v324 = vld [vmem:[#allocation2 + $0x30] sm:$0xff]
      %v325 = vld [vmem:[#allocation2 + $0x38] sm:$0xff]
      %v326 = vld [vmem:[#allocation2 + $0x40] sm:$0xff]
      %v327 = vld [vmem:[#allocation2 + $0x48] sm:$0xff]
      %v328 = vld [vmem:[#allocation2 + $0x50] sm:$0xff]
      %v329 = vld [vmem:[#allocation2 + $0x58] sm:$0xff]
      %v330 = vld [vmem:[%s3] sm:$0xff]
      %v331 = vld [vmem:[%s3 + $0x8] sm:$0xff]
      %v332 = vld [vmem:[%s3 + $0x10] sm:$0xff]
      %v333 = vld [vmem:[%s3 + $0x18] sm:$0xff]
      %335 = vset.pattern.permute.xlu0 0
      %336 = vperm.xlu0 %335, %v330
      %v337 = vpop.permute.xlu0 %336
      %340 = vset.pattern.permute.xlu0 0
      %341 = vperm.xlu0 %340, %v331
      %v342 = vpop.permute.xlu0 %341
      %345 = vset.pattern.permute.xlu0 0
      %346 = vperm.xlu0 %345, %v332
      %v347 = vpop.permute.xlu0 %346
      %350 = vset.pattern.permute.xlu0 0
      %351 = vperm.xlu0 %350, %v333
      %v352 = vpop.permute.xlu0 %351
      %vm354 = vcmask 785408
      %v356 = vsel %vm354, %v314, 0
      %v359 = vsel %vm354, %v315, 0
      %v362 = vsel %vm354, %v316, 0
      %v365 = vsel %vm354, %v317, 0
      %367 = vmatprep.subr.mxu0 0.0
      %368 = vmatpush1.msra.mxu0 0.0
      %369 = vmatprep.subr.mxu0 0.0
      %370 = vmatpush1.msra.mxu0 0.0
      %371 = vmatprep.subr.mxu0 0.0
      %372 = vmatpush1.msra.mxu0 0.0
      %373 = vmatprep.subr.mxu0 0.0
      %374 = vmatpush1.msra.mxu0 0.0
      %375 = vmatprep.subr.mxu0 0.0
      %376 = vmatpush1.msra.mxu0 %v329
      %377 = vmatprep.subr.mxu0 0.0
      %378 = vmatpush1.msra.mxu0 %v328
      %379 = vmatprep.subr.mxu0 0.0
      %380 = vmatpush1.msra.mxu0 %v327
      %381 = vmatprep.subr.mxu0 0.0
      %382 = vmatpush1.msra.mxu0 %v326
      %383 = vmatprep.subr.mxu0 0.0
      %384 = vmatpush1.msra.mxu0 %v325
      %385 = vmatprep.subr.mxu0 0.0
      %386 = vmatpush1.msra.mxu0 %v324
      %387 = vmatprep.subr.mxu0 0.0
      %388 = vmatpush1.msra.mxu0 %v323
      %389 = vmatprep.subr.mxu0 0.0
      %390 = vmatpush1.msra.mxu0 %v322
      %391 = vmatprep.subr.mxu0 0.0
      %392 = vmatpush1.msra.mxu0 %v321
      %393 = vmatprep.subr.mxu0 0.0
      %394 = vmatpush1.msra.mxu0 %v320
      %395 = vmatprep.subr.mxu0 0.0
      %396 = vmatpush1.msra.mxu0 %v319
      %397 = vmatprep.subr.mxu0 0.0
      %398 = vmatpush1.msra.mxu0 %v318
      %399 = vmatprep.subr.mxu0 0.0
      %400 = vmatpush2.msra.mxu0 0.0
      %401 = vmatprep.subr.mxu0 0.0
      %402 = vmatpush2.msra.mxu0 0.0
      %403 = vmatprep.subr.mxu0 0.0
      %404 = vmatpush2.msra.mxu0 0.0
      %405 = vmatprep.subr.mxu0 0.0
      %406 = vmatpush2.msra.mxu0 0.0
      %407 = vmatprep.subr.mxu0 0.0
      %408 = vmatpush2.msra.mxu0 0.0
      %409 = vmatprep.subr.mxu0 0.0
      %410 = vmatpush2.msra.mxu0 0.0
      %411 = vmatprep.subr.mxu0 0.0
      %412 = vmatpush2.msra.mxu0 0.0
      %413 = vmatprep.subr.mxu0 0.0
      %414 = vmatpush2.msra.mxu0 0.0
      %415 = vmatprep.subr.mxu0 0.0
      %416 = vmatpush2.msra.mxu0 0.0
      %417 = vmatprep.subr.mxu0 0.0
      %418 = vmatpush2.msra.mxu0 0.0
      %419 = vmatprep.subr.mxu0 0.0
      %420 = vmatpush2.msra.mxu0 0.0
      %421 = vmatprep.subr.mxu0 0.0
      %422 = vmatpush2.msra.mxu0 0.0
      %423 = vmatprep.subr.mxu0 0.0
      %424 = vmatpush2.msra.mxu0 0.0
      %425 = vmatprep.subr.mxu0 0.0
      %426 = vmatpush2.msra.mxu0 0.0
      %427 = vmatprep.subr.mxu0 0.0
      %428 = vmatpush2.msra.mxu0 0.0
      %429 = vmatprep.subr.mxu0 0.0
      %430 = vmatpush2.msra.mxu0 0.0
      %431 = vmatprep.mubr.f32.mxu0 0.0
      %432 = vmatmul.mubr.f32.gmra.mxu0 %v356
      %v433 = vpop.f32.mrf.mxu0
      %v434 = vadd.f32 %v337, %v433
      %v435 = vpop.f32.mrf.mxu0
      %436 = vmatprep.mubr.f32.mxu0 0.0
      %437 = vmatmul.mubr.f32.gmra.mxu0 %v359
      %v438 = vpop.f32.mrf.mxu0
      %v439 = vadd.f32 %v342, %v438
      %v440 = vpop.f32.mrf.mxu0
      %441 = vmatprep.mubr.f32.mxu0 0.0
      %442 = vmatmul.mubr.f32.gmra.mxu0 %v362
      %v443 = vpop.f32.mrf.mxu0
      %v444 = vadd.f32 %v347, %v443
      %v445 = vpop.f32.mrf.mxu0
      %446 = vmatprep.mubr.f32.mxu0 0.0
      %447 = vmatmul.mubr.f32.gmra.mxu0 %v365
      %v448 = vpop.f32.mrf.mxu0
      %v449 = vadd.f32 %v352, %v448
      %v450 = vpop.f32.mrf.mxu0
      %451 = vdwg.mxu0
      %v452 = vmax.f32 %v434, 0.0
      %v453 = vmax.f32 %v439, 0.0
      %v454 = vmax.f32 %v444, 0.0
      %v455 = vmax.f32 %v449, 0.0
      %v456 = vld [vmem:[%s4] sm:$0xff]
      %v457 = vld [vmem:[%s4 + $0x8] sm:$0xff]
      %v458 = vld [vmem:[%s4 + $0x10] sm:$0xff]
      %v459 = vld [vmem:[%s4 + $0x18] sm:$0xff]
      %v460 = vld [vmem:[%s5] sm:$0xff]
      %v461 = vld [vmem:[%s5 + $0x8] sm:$0xff]
      %v462 = vld [vmem:[%s5 + $0x10] sm:$0xff]
      %v463 = vld [vmem:[%s5 + $0x18] sm:$0xff]
      %465 = vset.pattern.permute.xlu0 0
      %466 = vperm.xlu0 %465, %v460
      %v467 = vpop.permute.xlu0 %466
      %470 = vset.pattern.permute.xlu0 0
      %471 = vperm.xlu0 %470, %v461
      %v472 = vpop.permute.xlu0 %471
      %475 = vset.pattern.permute.xlu0 0
      %476 = vperm.xlu0 %475, %v462
      %v477 = vpop.permute.xlu0 %476
      %480 = vset.pattern.permute.xlu0 0
      %481 = vperm.xlu0 %480, %v463
      %v482 = vpop.permute.xlu0 %481
      %vm484 = vcmask 261120
      %v486 = vsel %vm484, %v456, 0
      %v489 = vsel %vm484, %v457, 0
      %v492 = vsel %vm484, %v458, 0
      %v495 = vsel %vm484, %v459, 0
      %497 = vmatprep.subr.mxu0 0.0
      %498 = vmatpush1.msra.mxu0 0.0
      %499 = vmatprep.subr.mxu0 0.0
      %500 = vmatpush1.msra.mxu0 0.0
      %501 = vmatprep.subr.mxu0 0.0
      %502 = vmatpush1.msra.mxu0 0.0
      %503 = vmatprep.subr.mxu0 0.0
      %504 = vmatpush1.msra.mxu0 0.0
      %505 = vmatprep.subr.mxu0 0.0
      %506 = vmatpush1.msra.mxu0 0.0
      %507 = vmatprep.subr.mxu0 0.0
      %508 = vmatpush1.msra.mxu0 0.0
      %509 = vmatprep.subr.mxu0 0.0
      %510 = vmatpush1.msra.mxu0 0.0
      %511 = vmatprep.subr.mxu0 0.0
      %512 = vmatpush1.msra.mxu0 0.0
      %513 = vmatprep.subr.mxu0 0.0
      %514 = vmatpush1.msra.mxu0 0.0
      %515 = vmatprep.subr.mxu0 0.0
      %516 = vmatpush1.msra.mxu0 0.0
      %517 = vmatprep.subr.mxu0 0.0
      %518 = vmatpush1.msra.mxu0 0.0
      %519 = vmatprep.subr.mxu0 0.0
      %520 = vmatpush1.msra.mxu0 0.0
      %521 = vmatprep.subr.mxu0 0.0
      %522 = vmatpush1.msra.mxu0 %v455
      %523 = vmatprep.subr.mxu0 0.0
      %524 = vmatpush1.msra.mxu0 %v454
      %525 = vmatprep.subr.mxu0 0.0
      %526 = vmatpush1.msra.mxu0 %v453
      %527 = vmatprep.subr.mxu0 0.0
      %528 = vmatpush1.msra.mxu0 %v452
      %529 = vmatprep.subr.mxu0 0.0
      %530 = vmatpush2.msra.mxu0 0.0
      %531 = vmatprep.subr.mxu0 0.0
      %532 = vmatpush2.msra.mxu0 0.0
      %533 = vmatprep.subr.mxu0 0.0
      %534 = vmatpush2.msra.mxu0 0.0
      %535 = vmatprep.subr.mxu0 0.0
      %536 = vmatpush2.msra.mxu0 0.0
      %537 = vmatprep.subr.mxu0 0.0
      %538 = vmatpush2.msra.mxu0 0.0
      %539 = vmatprep.subr.mxu0 0.0
      %540 = vmatpush2.msra.mxu0 0.0
      %541 = vmatprep.subr.mxu0 0.0
      %542 = vmatpush2.msra.mxu0 0.0
      %543 = vmatprep.subr.mxu0 0.0
      %544 = vmatpush2.msra.mxu0 0.0
      %545 = vmatprep.subr.mxu0 0.0
      %546 = vmatpush2.msra.mxu0 0.0
      %547 = vmatprep.subr.mxu0 0.0
      %548 = vmatpush2.msra.mxu0 0.0
      %549 = vmatprep.subr.mxu0 0.0
      %550 = vmatpush2.msra.mxu0 0.0
      %551 = vmatprep.subr.mxu0 0.0
      %552 = vmatpush2.msra.mxu0 0.0
      %553 = vmatprep.subr.mxu0 0.0
      %554 = vmatpush2.msra.mxu0 0.0
      %555 = vmatprep.subr.mxu0 0.0
      %556 = vmatpush2.msra.mxu0 0.0
      %557 = vmatprep.subr.mxu0 0.0
      %558 = vmatpush2.msra.mxu0 0.0
      %559 = vmatprep.subr.mxu0 0.0
      %560 = vmatpush2.msra.mxu0 0.0
      %561 = vmatprep.mubr.f32.mxu0 0.0
      %562 = vmatmul.mubr.f32.gmra.mxu0 %v486
      %v563 = vpop.f32.mrf.mxu0
      %v564 = vadd.f32 %v467, %v563
      %v565 = vpop.f32.mrf.mxu0
      %566 = vmatprep.mubr.f32.mxu0 0.0
      %567 = vmatmul.mubr.f32.gmra.mxu0 %v489
      %v568 = vpop.f32.mrf.mxu0
      %v569 = vadd.f32 %v472, %v568
      %v570 = vpop.f32.mrf.mxu0
      %571 = vmatprep.mubr.f32.mxu0 0.0
      %572 = vmatmul.mubr.f32.gmra.mxu0 %v492
      %v573 = vpop.f32.mrf.mxu0
      %v574 = vadd.f32 %v477, %v573
      %v575 = vpop.f32.mrf.mxu0
      %576 = vmatprep.mubr.f32.mxu0 0.0
      %577 = vmatmul.mubr.f32.gmra.mxu0 %v495
      %v578 = vpop.f32.mrf.mxu0
      %v579 = vadd.f32 %v482, %v578
      %v580 = vpop.f32.mrf.mxu0
      %581 = vdwg.mxu0
      %v582 = vld [vmem:[%s248] sm:$0xff]
      %v583 = vld [vmem:[%s248 + $0x8] sm:$0xff]
      %v584 = vld [vmem:[%s248 + $0x10] sm:$0xff]
      %v585 = vld [vmem:[%s248 + $0x18] sm:$0xff]
      %v586 = vadd.f32 %v582, %v564
      %v587 = vadd.f32 %v583, %v569
      %v588 = vadd.f32 %v584, %v574
      %v589 = vadd.f32 %v585, %v579
      %590 = vst.msk [vmem:[%s256] sm:$0xff] %vm261, %v586
      %591 = vst.msk [vmem:[%s256 + $0x8] sm:$0xff] %vm261, %v587
      %592 = vst.msk [vmem:[%s256 + $0x10] sm:$0xff] %vm261, %v588
      %593 = vst.msk [vmem:[%s256 + $0x18] sm:$0xff] %vm261, %v589
      %p594 = scmp.lt.s32.totalorder %s21, 1
      %s595 = scalar_select %p594, %s21, 1
      %p596 = scmp.lt.s32.totalorder %s22, 0
      %s597 = scalar_select %p596, %s22, 0
      %s598 = smul.addr %s595, 4
      %s599 = sadd.s32 %s597, %s598
      %s600 = smul.addr %s599, 8
      %s601 = scalar_lea.vmem %s6, %s600
      // Predicated region
      $region41: #{tpu_custom_call.1} parent=39 // pred_check
        %p602 = pneg %p161
      $region42: #{tpu_custom_call.1} parent=39 // pred_check_branch
        %604 = sbr.rel (%p602) target = $region44
      $region43: #{tpu_custom_call.1} parent=39 // pred_region
        _
      $region44: #{tpu_custom_call.1} parent=39 // pred_fallthru
        _
    $region40: #{tpu_custom_call.1} parent=5 // pred_fallthru
      _
    %p605 = scmp.le.s32.totalorder 2, %s12
    // Predicated region
    $region45: #{tpu_custom_call.1} parent=5 // pred_check
      %p606 = pneg %p605
    $region46: #{tpu_custom_call.1} parent=5 // pred_check_branch
      %608 = sbr.rel (%p606) target = $region48
    $region47: #{tpu_custom_call.1} parent=5 // pred_region
      %s609 = ssub.s32 %s12, 2
      // Predicated region
      $region49: #{tpu_custom_call.1} parent=47 // pred_check
        %p610 = pneg %p167
      $region50: #{tpu_custom_call.1} parent=47 // pred_check_branch
        %612 = sbr.rel (%p610) target = $region52
      $region51: #{tpu_custom_call.1} parent=47 // pred_region
        %p613 = scmp.lt.s32.totalorder %s23, 1
        %s614 = scalar_select %p613, %s23, 1
        %p615 = scmp.lt.s32.totalorder %s24, 0
        %s616 = scalar_select %p615, %s24, 0
        %s617 = smul.addr %s614, 4
        %s618 = sadd.s32 %s616, %s617
        %s619 = smul.addr %s618, 8
        %s620 = scalar_lea.vmem %s6, %s619
      $region52: #{tpu_custom_call.1} parent=47 // pred_fallthru
        _
    $region48: #{tpu_custom_call.1} parent=5 // pred_fallthru
      _
  $region6: #{tpu_custom_call.1} parent=0 // loop_footer
    %s16 = sadd.s32 1, %s12
  $region7: #{tpu_custom_call.1} parent=0 // loop_footer_branch
    %11 = sbr.rel target = $region3
  $region8: #{tpu_custom_call.1} parent=0 // loop_exit
    _
  %621 = vsyncmov [#allocation5]
  %s622 = vpop.sfrf %621
  %p623 = scmp.eq.s32.totalorder %s622, 0
  %p624 = pneg %p623
  %626 = shalt.err (%p624)
  %s627 = scalar_lea.sflag [#allocation5], 1
  %628 = vsyncmov %s627
  %s629 = vpop.sfrf %628
  %p630 = scmp.eq.s32.totalorder %s629, 0
  %p631 = pneg %p630
  %633 = shalt.err (%p631)

</llo_original>
